<compile_context>
chip_gen: v7x
topology: tpu7x:2x2x1
jax: 0.10.0
libtpu: 0.0.40
codegen_flags: <defaults>
</compile_context>

<pallas_src>
import functools

import jax
import jax.numpy as jnp
from jax.experimental import pallas as pl
from jax.experimental.pallas import tpu as pltpu


def _se_kernel(x_ref, w1_ref, b1_ref, w2_ref, b2_ref, o_ref, *, inv_hw):
    # Squeeze: global average pool over the lane (flattened spatial) axis,
    # accumulated in f32.  Zero lane-padding contributes 0; inv_hw = 1/true_HW.
    y = jnp.sum(x_ref[...], axis=-1, dtype=jnp.float32) * inv_hw          # (bt, C)

    # Excitation: Linear -> ReLU -> Linear -> Sigmoid, all in f32.
    h = jnp.dot(y, w1_ref[...], preferred_element_type=jnp.float32) + b1_ref[...]
    h = jnp.maximum(h, 0.0)
    s = jnp.dot(h, w2_ref[...], preferred_element_type=jnp.float32) + b2_ref[...]
    s = jax.nn.sigmoid(s)                                                 # (bt, C)

    # Scale: second (streamed) read of x_ref; the per-channel gate broadcasts
    # along the lane axis.  Multiply happens in the input dtype (exact for f32;
    # for bf16 this differs from an all-f32 multiply by one rounding step).
    o_ref[...] = x_ref[...] * s.astype(o_ref.dtype)[:, :, None]


def _tpu_plan():
    """(vmem_limit_bytes, dual_core) for the current TPU generation."""
    try:
        vmem_cap = int(pltpu.get_tpu_info().vmem_capacity_bytes)
    except Exception:
        vmem_cap = 64 * 1024 * 1024              # conservative fallback (v7x-sized)
    if vmem_cap <= 80 * 1024 * 1024:
        # v7x-class: 64 MiB physical per TensorCore, 2 TensorCores per chip.
        return 48 * 1024 * 1024, True
    # v5e / v6e-class: 128 MiB physical, single TensorCore per chip.
    return 96 * 1024 * 1024, False


def _choose_bt(B, per_b_bytes, x_tile_budget, dual_core):
    """Pick batch rows per grid step (bt) and number of grid steps."""
    cap = max(1, x_tile_budget // per_b_bytes)
    if dual_core and B >= 2:
        cap = min(cap, -(-B // 2))               # >=2 steps so both TCs get work
    cap = min(cap, B)
    best_div = 1
    for d in range(1, cap + 1):                  # largest divisor of B <= cap
        if B % d == 0:
            best_div = d
    # Use the divisor unless it leaves tiles far below target; otherwise take the
    # full cap and pad B (avoids bt=1 tiny tiles for prime/awkward batch sizes).
    if best_div == cap or best_div * per_b_bytes >= min(cap * per_b_bytes, 4 * 1024 * 1024):
        bt = best_div
    else:
        bt = cap
    steps = -(-B // bt)
    if dual_core and steps > 1 and steps % 2 == 1:
        steps += 1                               # even split across 2 TensorCores
    return bt, steps


def se_block(x, w1, b1, w2, b2):
    """x: (B, C, H, W).  w1: (C, Cr), b1: (1, Cr), w2: (Cr, C), b2: (1, C)."""
    B, C, H, W = x.shape
    HW = H * W
    Cr = w1.shape[1]
    itemsize = x.dtype.itemsize

    # Lane-dense spatial axis: pad H*W up to a multiple of 128 if needed.
    HWp = -(-HW // 128) * 128
    # Pad the bottleneck width to 128 lanes; zero padding is exact
    # (relu(0 + 0) = 0 and the matching zero rows of w2 contribute 0).
    Crp = -(-Cr // 128) * 128
    if Crp != Cr:
        w1 = jnp.pad(w1, ((0, 0), (0, Crp - Cr)))
        b1 = jnp.pad(b1, ((0, 0), (0, Crp - Cr)))
        w2 = jnp.pad(w2, ((0, Crp - Cr), (0, 0)))

    vmem_limit, dual_core = _tpu_plan()
    weight_bytes = sum(int(a.size) * a.dtype.itemsize for a in (w1, b1, w2, b2))
    reserve = 2 * weight_bytes + 2 * 1024 * 1024     # dbl-buffered weights + slack
    per_b = C * HWp * itemsize                       # bytes of one batch row tile
    # 2 x (in + out) double-buffered x tiles must fit under the VMEM limit.
    # (A single batch row larger than ~10 MiB would need additional C/HW tiling,
    #  which an SE block's feature maps do not reach in practice.)
    x_tile_budget = min(10 * 1024 * 1024, max(per_b, (vmem_limit - reserve) // 4))

    bt, steps = _choose_bt(B, per_b, x_tile_budget, dual_core)
    B_pad = bt * steps

    x3 = x.reshape(B, C, HW)
    if B_pad != B or HWp != HW:
        x3 = jnp.pad(x3, ((0, B_pad - B), (0, 0), (0, HWp - HW)))

    cost = pl.CostEstimate(
        flops=2 * B * C * HW + 4 * B * C * Crp,
        transcendentals=B * C,
        bytes_accessed=2 * B * C * HW * itemsize + weight_bytes,
    )

    kernel = functools.partial(_se_kernel, inv_hw=1.0 / HW)

    def _weight_spec(shape, single_buffer):
        idx = lambda b: (0,) * len(shape)
        if single_buffer:
            # Constant block across the grid -> a second buffer is dead weight.
            return pl.BlockSpec(shape, idx, pipeline_mode=pl.Buffered(1))
        return pl.BlockSpec(shape, idx)

    def _run(single_buffer_weights):
        return pl.pallas_call(
            kernel,
            out_shape=jax.ShapeDtypeStruct((B_pad, C, HWp), x.dtype),
            grid_spec=pltpu.PrefetchScalarGridSpec(
                num_scalar_prefetch=0,
                grid=(steps,),
                in_specs=[
                    pl.BlockSpec((bt, C, HWp), lambda b: (b, 0, 0)),
                    _weight_spec((C, Crp), single_buffer_weights),
                    _weight_spec((1, Crp), single_buffer_weights),
                    _weight_spec((Crp, C), single_buffer_weights),
                    _weight_spec((1, C), single_buffer_weights),
                ],
                out_specs=pl.BlockSpec((bt, C, HWp), lambda b: (b, 0, 0)),
            ),
            compiler_params=pltpu.CompilerParams(
                dimension_semantics=("parallel",),
                vmem_limit_bytes=vmem_limit,
            ),
            cost_estimate=cost,
        )(x3, w1, b1, w2, b2)

    try:
        out3 = _run(True)            # single-buffered constant weights
    except Exception:
        out3 = _run(False)           # fallback: default (double) buffering

    out3 = out3[:B, :, :HW]
    return out3.reshape(B, C, H, W)


def se_block_ref(x, w1, b1, w2, b2):
    """Pure-JAX reference matching the PyTorch SEBlock forward semantics."""
    xf = x.astype(jnp.float32)
    y = jnp.mean(xf, axis=(2, 3))                       # (B, C)
    h = jnp.maximum(y @ w1 + b1, 0.0)                   # (B, Cr)
    s = jax.nn.sigmoid(h @ w2 + b2)                     # (B, C)
    return (xf * s[:, :, None, None]).astype(x.dtype)


if __name__ == "__main__":
    # Shapes consistent with SEBlock(channel=32, reduction=16).
    B, C, H, W = 2, 32, 16, 16
    reduction = 16
    Cr = C // reduction  # 2

    key = jax.random.PRNGKey(0)
    kx, k1, kb1, k2, kb2 = jax.random.split(key, 5)

    x = jax.random.normal(kx, (B, C, H, W), dtype=jnp.float32)

    # Deterministic parameter init (PyTorch Linear-style uniform bounds).
    bound1 = 1.0 / (C ** 0.5)
    w1 = jax.random.uniform(k1, (C, Cr), jnp.float32, -bound1, bound1)
    b1 = jax.random.uniform(kb1, (1, Cr), jnp.float32, -bound1, bound1)
    bound2 = 1.0 / (Cr ** 0.5)
    w2 = jax.random.uniform(k2, (Cr, C), jnp.float32, -bound2, bound2)
    b2 = jax.random.uniform(kb2, (1, C), jnp.float32, -bound2, bound2)

    out = se_block(x, w1, b1, w2, b2)
    out = jax.block_until_ready(out)

    ref = se_block_ref(x, w1, b1, w2, b2)
    assert out.shape == (B, C, H, W)
    assert jnp.allclose(out, ref, atol=1e-5, rtol=1e-5), "mismatch vs reference"

    print("KERNEL_OK")
</pallas_src>

<mosaic_0001>
module attributes {stable_mosaic.version = 11 : i64} {
  func.func @_se_kernel(%arg0: i32, %arg1: memref<1x32x256xf32, #tpu.memory_space<vmem>>, %arg2: memref<32x128xf32, #tpu.memory_space<vmem>>, %arg3: memref<1x128xf32, #tpu.memory_space<vmem>>, %arg4: memref<128x32xf32, #tpu.memory_space<vmem>>, %arg5: memref<1x32xf32, #tpu.memory_space<vmem>>, %arg6: memref<1x32x256xf32, #tpu.memory_space<vmem>>) attributes {dimension_semantics = [#tpu.dimension_semantics<parallel>], iteration_bounds = array<i64: 2>, scalar_prefetch = 0 : i64, scratch_operands = 0 : i64, tpu.core_type = #tpu.core_type<tc>, window_params = [{transform_indices = @transform_0, window_bounds = array<i64: 1, 32, 256>}, {pipeline_mode = #tpu.pipeline_mode<synchronous>, transform_indices = @transform_1, window_bounds = array<i64: 32, 128>}, {pipeline_mode = #tpu.pipeline_mode<synchronous>, transform_indices = @transform_2, window_bounds = array<i64: 1, 128>}, {pipeline_mode = #tpu.pipeline_mode<synchronous>, transform_indices = @transform_3, window_bounds = array<i64: 128, 32>}, {pipeline_mode = #tpu.pipeline_mode<synchronous>, transform_indices = @transform_4, window_bounds = array<i64: 1, 32>}, {transform_indices = @transform_5, window_bounds = array<i64: 1, 32, 256>}]} {
    %c0 = arith.constant 0 : index
    %c0_0 = arith.constant 0 : index
    %c0_1 = arith.constant 0 : index
    %0 = vector.load %arg1[%c0, %c0_0, %c0_1] : memref<1x32x256xf32, #tpu.memory_space<vmem>>, vector<1x32x256xf32>
    %cst = arith.constant dense<0.000000e+00> : vector<1x32xf32>
    %1 = vector.multi_reduction <add>, %0, %cst [2] : vector<1x32x256xf32> to vector<1x32xf32>
    %cst_2 = arith.constant 3.906250e-03 : f32
    %2 = vector.broadcast %cst_2 : f32 to vector<1x32xf32>
    %3 = arith.mulf %1, %2 : vector<1x32xf32>
    %c0_3 = arith.constant 0 : index
    %c0_4 = arith.constant 0 : index
    %4 = vector.load %arg2[%c0_3, %c0_4] : memref<32x128xf32, #tpu.memory_space<vmem>>, vector<32x128xf32>
    %cst_5 = arith.constant dense<0.000000e+00> : vector<1x128xf32>
    %5 = tpu.matmul %3, %4, %cst_5 {dimension_numbers = #tpu.dot_dimension_numbers<[1], [0], [0], [1], [0, 0, 1, 1], [], []>} : vector<1x32xf32>, vector<32x128xf32>, vector<1x128xf32> -> vector<1x128xf32>
    %c0_6 = arith.constant 0 : index
    %c0_7 = arith.constant 0 : index
    %6 = vector.load %arg3[%c0_6, %c0_7] : memref<1x128xf32, #tpu.memory_space<vmem>>, vector<1x128xf32>
    %7 = arith.addf %5, %6 : vector<1x128xf32>
    %cst_8 = arith.constant 0.000000e+00 : f32
    %8 = vector.broadcast %cst_8 : f32 to vector<1x128xf32>
    %9 = arith.maximumf %7, %8 : vector<1x128xf32>
    %c0_9 = arith.constant 0 : index
    %c0_10 = arith.constant 0 : index
    %10 = vector.load %arg4[%c0_9, %c0_10] : memref<128x32xf32, #tpu.memory_space<vmem>>, vector<128x32xf32>
    %cst_11 = arith.constant dense<0.000000e+00> : vector<1x32xf32>
    %11 = tpu.matmul %9, %10, %cst_11 {dimension_numbers = #tpu.dot_dimension_numbers<[1], [0], [0], [1], [0, 0, 1, 1], [], []>} : vector<1x128xf32>, vector<128x32xf32>, vector<1x32xf32> -> vector<1x32xf32>
    %c0_12 = arith.constant 0 : index
    %c0_13 = arith.constant 0 : index
    %12 = vector.load %arg5[%c0_12, %c0_13] : memref<1x32xf32, #tpu.memory_space<vmem>>, vector<1x32xf32>
    %13 = arith.addf %11, %12 : vector<1x32xf32>
    %14 = arith.negf %13 : vector<1x32xf32>
    %15 = math.exp %14 : vector<1x32xf32>
    %cst_14 = arith.constant 1.000000e+00 : f32
    %16 = vector.broadcast %cst_14 : f32 to vector<1x32xf32>
    %17 = arith.addf %16, %15 : vector<1x32xf32>
    %18 = arith.divf %16, %17 : vector<1x32xf32>
    %c0_15 = arith.constant 0 : index
    %c0_16 = arith.constant 0 : index
    %c0_17 = arith.constant 0 : index
    %19 = vector.load %arg1[%c0_15, %c0_16, %c0_17] : memref<1x32x256xf32, #tpu.memory_space<vmem>>, vector<1x32x256xf32>
    %20 = vector.shape_cast %18 : vector<1x32xf32> to vector<1x32x1xf32>
    %21 = vector.broadcast %20 : vector<1x32x1xf32> to vector<1x32x256xf32>
    %22 = arith.mulf %19, %21 : vector<1x32x256xf32>
    %c0_18 = arith.constant 0 : index
    %c0_19 = arith.constant 0 : index
    %c0_20 = arith.constant 0 : index
    %23 = vector.load %arg6[%c0_18, %c0_19, %c0_20] : memref<1x32x256xf32, #tpu.memory_space<vmem>>, vector<1x32x256xf32>
    tpu.vector_store %arg6[%c0_18, %c0_19, %c0_20], %22 {strides = array<i32>} : memref<1x32x256xf32, #tpu.memory_space<vmem>>, vector<1x32x256xf32>,
    return
  }
  func.func @transform_0(%arg0: i32) -> (i32, i32, i32) {
    %c0_i32 = arith.constant 0 : i32
    %c0_i32_0 = arith.constant 0 : i32
    %c0_i32_1 = arith.constant 0 : i32
    return %arg0, %c0_i32, %c0_i32_0 : i32, i32, i32
  }
  func.func @transform_1(%arg0: i32) -> (i32, i32) {
    %c0_i32 = arith.constant 0 : i32
    %c0_i32_0 = arith.constant 0 : i32
    %c0_i32_1 = arith.constant 0 : i32
    return %c0_i32, %c0_i32_0 : i32, i32
  }
  func.func @transform_2(%arg0: i32) -> (i32, i32) {
    %c0_i32 = arith.constant 0 : i32
    %c0_i32_0 = arith.constant 0 : i32
    %c0_i32_1 = arith.constant 0 : i32
    return %c0_i32, %c0_i32_0 : i32, i32
  }
  func.func @transform_3(%arg0: i32) -> (i32, i32) {
    %c0_i32 = arith.constant 0 : i32
    %c0_i32_0 = arith.constant 0 : i32
    %c0_i32_1 = arith.constant 0 : i32
    return %c0_i32, %c0_i32_0 : i32, i32
  }
  func.func @transform_4(%arg0: i32) -> (i32, i32) {
    %c0_i32 = arith.constant 0 : i32
    %c0_i32_0 = arith.constant 0 : i32
    %c0_i32_1 = arith.constant 0 : i32
    return %c0_i32, %c0_i32_0 : i32, i32
  }
  func.func @transform_5(%arg0: i32) -> (i32, i32, i32) {
    %c0_i32 = arith.constant 0 : i32
    %c0_i32_0 = arith.constant 0 : i32
    %c0_i32_1 = arith.constant 0 : i32
    return %arg0, %c0_i32, %c0_i32_0 : i32, i32, i32
  }
}

module attributes {stable_mosaic.version = 11 : i64} {
  func.func @_se_kernel(%arg0: i32, %arg1: memref<1x32x256xf32, #tpu.memory_space<vmem>>, %arg2: memref<32x128xf32, #tpu.memory_space<vmem>>, %arg3: memref<1x128xf32, #tpu.memory_space<vmem>>, %arg4: memref<128x32xf32, #tpu.memory_space<vmem>>, %arg5: memref<1x32xf32, #tpu.memory_space<vmem>>, %arg6: memref<1x32x256xf32, #tpu.memory_space<vmem>>) attributes {dimension_semantics = [#tpu.dimension_semantics<parallel>], iteration_bounds = array<i64: 2>, scalar_prefetch = 0 : i64, scratch_operands = 0 : i64, tpu.core_type = #tpu.core_type<tc>, window_params = [{transform_indices = @transform_0, window_bounds = array<i64: 1, 32, 256>}, {pipeline_mode = #tpu.pipeline_mode<synchronous>, transform_indices = @transform_1, window_bounds = array<i64: 32, 128>}, {pipeline_mode = #tpu.pipeline_mode<synchronous>, transform_indices = @transform_2, window_bounds = array<i64: 1, 128>}, {pipeline_mode = #tpu.pipeline_mode<synchronous>, transform_indices = @transform_3, window_bounds = array<i64: 128, 32>}, {pipeline_mode = #tpu.pipeline_mode<synchronous>, transform_indices = @transform_4, window_bounds = array<i64: 1, 32>}, {transform_indices = @transform_5, window_bounds = array<i64: 1, 32, 256>}]} {
    %c0 = arith.constant 0 : index
    %c0_0 = arith.constant 0 : index
    %c0_1 = arith.constant 0 : index
    %0 = vector.load %arg1[%c0, %c0_0, %c0_1] : memref<1x32x256xf32, #tpu.memory_space<vmem>>, vector<1x32x256xf32>
    %cst = arith.constant dense<0.000000e+00> : vector<1x32xf32>
    %1 = vector.multi_reduction <add>, %0, %cst [2] : vector<1x32x256xf32> to vector<1x32xf32>
    %cst_2 = arith.constant 3.906250e-03 : f32
    %2 = vector.broadcast %cst_2 : f32 to vector<1x32xf32>
    %3 = arith.mulf %1, %2 : vector<1x32xf32>
    %c0_3 = arith.constant 0 : index
    %c0_4 = arith.constant 0 : index
    %4 = vector.load %arg2[%c0_3, %c0_4] : memref<32x128xf32, #tpu.memory_space<vmem>>, vector<32x128xf32>
    %cst_5 = arith.constant dense<0.000000e+00> : vector<1x128xf32>
    %5 = tpu.matmul %3, %4, %cst_5 {dimension_numbers = #tpu.dot_dimension_numbers<[1], [0], [0], [1], [0, 0, 1, 1], [], []>} : vector<1x32xf32>, vector<32x128xf32>, vector<1x128xf32> -> vector<1x128xf32>
    %c0_6 = arith.constant 0 : index
    %c0_7 = arith.constant 0 : index
    %6 = vector.load %arg3[%c0_6, %c0_7] : memref<1x128xf32, #tpu.memory_space<vmem>>, vector<1x128xf32>
    %7 = arith.addf %5, %6 : vector<1x128xf32>
    %cst_8 = arith.constant 0.000000e+00 : f32
    %8 = vector.broadcast %cst_8 : f32 to vector<1x128xf32>
    %9 = arith.maximumf %7, %8 : vector<1x128xf32>
    %c0_9 = arith.constant 0 : index
    %c0_10 = arith.constant 0 : index
    %10 = vector.load %arg4[%c0_9, %c0_10] : memref<128x32xf32, #tpu.memory_space<vmem>>, vector<128x32xf32>
    %cst_11 = arith.constant dense<0.000000e+00> : vector<1x32xf32>
    %11 = tpu.matmul %9, %10, %cst_11 {dimension_numbers = #tpu.dot_dimension_numbers<[1], [0], [0], [1], [0, 0, 1, 1], [], []>} : vector<1x128xf32>, vector<128x32xf32>, vector<1x32xf32> -> vector<1x32xf32>
    %c0_12 = arith.constant 0 : index
    %c0_13 = arith.constant 0 : index
    %12 = vector.load %arg5[%c0_12, %c0_13] : memref<1x32xf32, #tpu.memory_space<vmem>>, vector<1x32xf32>
    %13 = arith.addf %11, %12 : vector<1x32xf32>
    %14 = arith.negf %13 : vector<1x32xf32>
    %15 = math.exp %14 : vector<1x32xf32>
    %cst_14 = arith.constant 1.000000e+00 : f32
    %16 = vector.broadcast %cst_14 : f32 to vector<1x32xf32>
    %17 = arith.addf %16, %15 : vector<1x32xf32>
    %18 = arith.divf %16, %17 : vector<1x32xf32>
    %c0_15 = arith.constant 0 : index
    %c0_16 = arith.constant 0 : index
    %c0_17 = arith.constant 0 : index
    %19 = vector.load %arg1[%c0_15, %c0_16, %c0_17] : memref<1x32x256xf32, #tpu.memory_space<vmem>>, vector<1x32x256xf32>
    %20 = vector.shape_cast %18 : vector<1x32xf32> to vector<1x32x1xf32>
    %21 = vector.broadcast %20 : vector<1x32x1xf32> to vector<1x32x256xf32>
    %22 = arith.mulf %19, %21 : vector<1x32x256xf32>
    %c0_18 = arith.constant 0 : index
    %c0_19 = arith.constant 0 : index
    %c0_20 = arith.constant 0 : index
    %23 = vector.load %arg6[%c0_18, %c0_19, %c0_20] : memref<1x32x256xf32, #tpu.memory_space<vmem>>, vector<1x32x256xf32>
    tpu.vector_store %arg6[%c0_18, %c0_19, %c0_20], %22 {strides = array<i32>} : memref<1x32x256xf32, #tpu.memory_space<vmem>>, vector<1x32x256xf32>,
    return
  }
  func.func @transform_0(%arg0: i32) -> (i32, i32, i32) {
    %c0_i32 = arith.constant 0 : i32
    %c0_i32_0 = arith.constant 0 : i32
    %c0_i32_1 = arith.constant 0 : i32
    return %arg0, %c0_i32, %c0_i32_0 : i32, i32, i32
  }
  func.func @transform_1(%arg0: i32) -> (i32, i32) {
    %c0_i32 = arith.constant 0 : i32
    %c0_i32_0 = arith.constant 0 : i32
    %c0_i32_1 = arith.constant 0 : i32
    return %c0_i32, %c0_i32_0 : i32, i32
  }
  func.func @transform_2(%arg0: i32) -> (i32, i32) {
    %c0_i32 = arith.constant 0 : i32
    %c0_i32_0 = arith.constant 0 : i32
    %c0_i32_1 = arith.constant 0 : i32
    return %c0_i32, %c0_i32_0 : i32, i32
  }
  func.func @transform_3(%arg0: i32) -> (i32, i32) {
    %c0_i32 = arith.constant 0 : i32
    %c0_i32_0 = arith.constant 0 : i32
    %c0_i32_1 = arith.constant 0 : i32
    return %c0_i32, %c0_i32_0 : i32, i32
  }
  func.func @transform_4(%arg0: i32) -> (i32, i32) {
    %c0_i32 = arith.constant 0 : i32
    %c0_i32_0 = arith.constant 0 : i32
    %c0_i32_1 = arith.constant 0 : i32
    return %c0_i32, %c0_i32_0 : i32, i32
  }
  func.func @transform_5(%arg0: i32) -> (i32, i32, i32) {
    %c0_i32 = arith.constant 0 : i32
    %c0_i32_0 = arith.constant 0 : i32
    %c0_i32_1 = arith.constant 0 : i32
    return %arg0, %c0_i32, %c0_i32_0 : i32, i32, i32
  }
}

</mosaic_0001>

<llo_original>
// kernel: tpu_custom_call.1
$region0: #{tpu_custom_call.1}
  #allocation0 [shape = 'u32[]', space=smem, size = 0x4, offset = 0x4, fixed_abs, tag = 'smem constant byte address 0x4 - core index']
  #allocation1 [shape = 'u32[144,128]{1,0:T(1,128)}', space=vmem, size = 0x12000, scoped, tag = 'internal scratch']
  %s0 = inlined_call_operand.vmem [shape: f32[2,32,256], index: 0, kind: input, shape index: {}]
  %s1 = inlined_call_operand.vmem [shape: f32[32,128], index: 1, kind: input, shape index: {}]
  %s2 = inlined_call_operand.vmem [shape: f32[1,128], index: 2, kind: input, shape index: {}]
  %s3 = inlined_call_operand.vmem [shape: f32[128,32], index: 3, kind: input, shape index: {}]
  %s4 = inlined_call_operand.vmem [shape: f32[1,32], index: 4, kind: input, shape index: {}]
  %s5 = inlined_call_operand.hbm [shape: f32[2,32,256], index: 5, kind: output, shape index: {}]
  %s6 = sld [smem:[#allocation0]]
  $region53: #{tpu_custom_call.1} parent=0
    _
  %s8 = ssub.s32 1, %s6
  %s9 = scalar_select 0, %s8, %s6
  $region1: #{tpu_custom_call.1} parent=0
    #allocation2 [shape = 'u8[65536]{0}', space=vmem, size = 0x10000, scoped, tag = 'output window, operand 0']
    #allocation3 [shape = 's32[2]{0}', space=sflag, size = 0x8, scoped, tag = 'scoped memory for tpu_custom_call.1']
    %10 = vsyncpa [#allocation3], 0
    %s11 = scalar_lea.sflag [#allocation3], 1
    %12 = vsyncpa %s11, 0
    loop: start=0, step=1, limit=4
    $region2: #{tpu_custom_call.1} parent=1 // loop_pre_header
      _
    $region3: #{tpu_custom_call.1} parent=1 // loop_header
      %s14 = sphi 0, %s18
      %p15 = scmp.ge.s32.totalorder %s14, 4
      %s24 = sphi 0, %s26
      %s27 = sphi 0, %s24
      %s28 = sphi 0, %s27
      %s44 = sphi 0, %s28
      %s48 = sphi 0, %s48
      %s50 = sphi 0, %s48
      %s51 = sphi 0, %s50
      %s65 = sphi 0, %s51
      %s69 = sphi 0, %s69
      %s71 = sphi 0, %s69
      %s72 = sphi 0, %s71
      %s86 = sphi 0, %s72
      %s90 = sphi 0, %s90
      %s92 = sphi 0, %s90
      %s93 = sphi 0, %s92
      %s107 = sphi 0, %s93
      %s111 = sphi 0, %s111
      %s113 = sphi 0, %s111
      %s114 = sphi 0, %s113
      %s128 = sphi 0, %s114
      %s134 = sphi 0, %s136
      %s137 = sphi 0, %s134
      %s138 = sphi 0, %s137
      %s154 = sphi 0, %s138
    $region4: #{tpu_custom_call.1} parent=1 // loop_header_branch
      %17 = sbr.rel (%p15) target = $region8
    $region5: #{tpu_custom_call.1} parent=1 // loop_body
      %s19 = ssub.s32 %s14, 1
      %s20 = ssub.s32 %s14, 2
      %s21 = sadd.s32 %s14, 1
      %s22 = ssub.s32 %s14, %s21
      %p23 = scmp.eq.s32.totalorder %s22, 0
      %s25 = sadd.s32 %s24, 1
      %s26 = scalar_select %p23, %s24, %s25
      %p29 = pneg %p23
      %p30 = scmp.eq.s32.totalorder %s14, 1
      %p31 = por %p29, %p30
      %p32 = scmp.ne.s32.totalorder %s24, %s27
      %p33 = scmp.eq.s32.totalorder %s14, 0
      %p34 = por %p32, %p33
      %p35 = scmp.ne.s32.totalorder %s24, %s27
      %p36 = scmp.eq.s32.totalorder %s19, 1
      %p37 = por %p35, %p36
      %p38 = scmp.ne.s32.totalorder %s27, %s28
      %p39 = scmp.eq.s32.totalorder %s19, 0
      %p40 = por %p38, %p39
      %p41 = scmp.ne.s32.totalorder %s27, %s28
      %p42 = scmp.eq.s32.totalorder %s20, 1
      %p43 = por %p41, %p42
      %p45 = scmp.ne.s32.totalorder %s28, %s44
      %p46 = scmp.eq.s32.totalorder %s20, 0
      %p47 = por %p45, %p46
      %s49 = sadd.s32 %s48, 1
      %p52 = scmp.eq.s32.totalorder %s14, 1
      %p53 = scmp.ne.s32.totalorder %s48, %s50
      %p54 = scmp.eq.s32.totalorder %s14, 0
      %p55 = por %p53, %p54
      %p56 = scmp.ne.s32.totalorder %s48, %s50
      %p57 = scmp.eq.s32.totalorder %s19, 1
      %p58 = por %p56, %p57
      %p59 = scmp.ne.s32.totalorder %s50, %s51
      %p60 = scmp.eq.s32.totalorder %s19, 0
      %p61 = por %p59, %p60
      %p62 = scmp.ne.s32.totalorder %s50, %s51
      %p63 = scmp.eq.s32.totalorder %s20, 1
      %p64 = por %p62, %p63
      %p66 = scmp.ne.s32.totalorder %s51, %s65
      %p67 = scmp.eq.s32.totalorder %s20, 0
      %p68 = por %p66, %p67
      %s70 = sadd.s32 %s69, 1
      %p73 = scmp.eq.s32.totalorder %s14, 1
      %p74 = scmp.ne.s32.totalorder %s69, %s71
      %p75 = scmp.eq.s32.totalorder %s14, 0
      %p76 = por %p74, %p75
      %p77 = scmp.ne.s32.totalorder %s69, %s71
      %p78 = scmp.eq.s32.totalorder %s19, 1
      %p79 = por %p77, %p78
      %p80 = scmp.ne.s32.totalorder %s71, %s72
      %p81 = scmp.eq.s32.totalorder %s19, 0
      %p82 = por %p80, %p81
      %p83 = scmp.ne.s32.totalorder %s71, %s72
      %p84 = scmp.eq.s32.totalorder %s20, 1
      %p85 = por %p83, %p84
      %p87 = scmp.ne.s32.totalorder %s72, %s86
      %p88 = scmp.eq.s32.totalorder %s20, 0
      %p89 = por %p87, %p88
      %s91 = sadd.s32 %s90, 1
      %p94 = scmp.eq.s32.totalorder %s14, 1
      %p95 = scmp.ne.s32.totalorder %s90, %s92
      %p96 = scmp.eq.s32.totalorder %s14, 0
      %p97 = por %p95, %p96
      %p98 = scmp.ne.s32.totalorder %s90, %s92
      %p99 = scmp.eq.s32.totalorder %s19, 1
      %p100 = por %p98, %p99
      %p101 = scmp.ne.s32.totalorder %s92, %s93
      %p102 = scmp.eq.s32.totalorder %s19, 0
      %p103 = por %p101, %p102
      %p104 = scmp.ne.s32.totalorder %s92, %s93
      %p105 = scmp.eq.s32.totalorder %s20, 1
      %p106 = por %p104, %p105
      %p108 = scmp.ne.s32.totalorder %s93, %s107
      %p109 = scmp.eq.s32.totalorder %s20, 0
      %p110 = por %p108, %p109
      %s112 = sadd.s32 %s111, 1
      %p115 = scmp.eq.s32.totalorder %s14, 1
      %p116 = scmp.ne.s32.totalorder %s111, %s113
      %p117 = scmp.eq.s32.totalorder %s14, 0
      %p118 = por %p116, %p117
      %p119 = scmp.ne.s32.totalorder %s111, %s113
      %p120 = scmp.eq.s32.totalorder %s19, 1
      %p121 = por %p119, %p120
      %p122 = scmp.ne.s32.totalorder %s113, %s114
      %p123 = scmp.eq.s32.totalorder %s19, 0
      %p124 = por %p122, %p123
      %p125 = scmp.ne.s32.totalorder %s113, %s114
      %p126 = scmp.eq.s32.totalorder %s20, 1
      %p127 = por %p125, %p126
      %p129 = scmp.ne.s32.totalorder %s114, %s128
      %p130 = scmp.eq.s32.totalorder %s20, 0
      %p131 = por %p129, %p130
      %s132 = ssub.s32 %s14, %s21
      %p133 = scmp.eq.s32.totalorder %s132, 0
      %s135 = sadd.s32 %s134, 1
      %s136 = scalar_select %p133, %s134, %s135
      %p139 = pneg %p133
      %p140 = scmp.eq.s32.totalorder %s14, 1
      %p141 = por %p139, %p140
      %p142 = scmp.ne.s32.totalorder %s134, %s137
      %p143 = scmp.eq.s32.totalorder %s14, 0
      %p144 = por %p142, %p143
      %p145 = scmp.ne.s32.totalorder %s134, %s137
      %p146 = scmp.eq.s32.totalorder %s19, 1
      %p147 = por %p145, %p146
      %p148 = scmp.ne.s32.totalorder %s137, %s138
      %p149 = scmp.eq.s32.totalorder %s19, 0
      %p150 = por %p148, %p149
      %p151 = scmp.ne.s32.totalorder %s137, %s138
      %p152 = scmp.eq.s32.totalorder %s20, 1
      %p153 = por %p151, %p152
      %p155 = scmp.ne.s32.totalorder %s138, %s154
      %p156 = scmp.eq.s32.totalorder %s20, 0
      %p157 = por %p155, %p156
      %p158 = scmp.le.s32.totalorder 1, %s14
      %p159 = scmp.lt.s32.totalorder %s14, 3
      %p160 = pnand %p158, %p159
      %p161 = pneg %p160
      // Predicated region
      $region9: #{tpu_custom_call.1} parent=5 // pred_check
        _
      $region10: #{tpu_custom_call.1} parent=5 // pred_check_branch
        %163 = sbr.rel (%p160) target = $region12
      $region11: #{tpu_custom_call.1} parent=5 // pred_region
        %s164 = ssub.s32 %s14, 1
        // Predicated region
        $region13: #{tpu_custom_call.1} parent=11 // pred_check
          %p165 = pneg %p61
        $region14: #{tpu_custom_call.1} parent=11 // pred_check_branch
          %167 = sbr.rel (%p165) target = $region16
        $region15: #{tpu_custom_call.1} parent=11 // pred_region
          _
        $region16: #{tpu_custom_call.1} parent=11 // pred_fallthru
          _
        // Predicated region
        $region17: #{tpu_custom_call.1} parent=11 // pred_check
          %p168 = pneg %p82
        $region18: #{tpu_custom_call.1} parent=11 // pred_check_branch
          %170 = sbr.rel (%p168) target = $region20
        $region19: #{tpu_custom_call.1} parent=11 // pred_region
          _
        $region20: #{tpu_custom_call.1} parent=11 // pred_fallthru
          _
        // Predicated region
        $region21: #{tpu_custom_call.1} parent=11 // pred_check
          %p171 = pneg %p103
        $region22: #{tpu_custom_call.1} parent=11 // pred_check_branch
          %173 = sbr.rel (%p171) target = $region24
        $region23: #{tpu_custom_call.1} parent=11 // pred_region
          _
        $region24: #{tpu_custom_call.1} parent=11 // pred_fallthru
          _
        // Predicated region
        $region25: #{tpu_custom_call.1} parent=11 // pred_check
          %p174 = pneg %p124
        $region26: #{tpu_custom_call.1} parent=11 // pred_check_branch
          %176 = sbr.rel (%p174) target = $region28
        $region27: #{tpu_custom_call.1} parent=11 // pred_region
          _
        $region28: #{tpu_custom_call.1} parent=11 // pred_fallthru
          _
      $region12: #{tpu_custom_call.1} parent=5 // pred_fallthru
        _
      %p177 = scmp.lt.s32.totalorder %s14, 2
      // Predicated region
      $region29: #{tpu_custom_call.1} parent=5 // pred_check
        %p178 = pneg %p177
      $region30: #{tpu_custom_call.1} parent=5 // pred_check_branch
        %180 = sbr.rel (%p178) target = $region32
      $region31: #{tpu_custom_call.1} parent=5 // pred_region
        // Predicated region
        $region33: #{tpu_custom_call.1} parent=31 // pred_check
          %p181 = pneg %p34
        $region34: #{tpu_custom_call.1} parent=31 // pred_check_branch
          %183 = sbr.rel (%p181) target = $region36
        $region35: #{tpu_custom_call.1} parent=31 // pred_region
          %p184 = scmp.lt.s32.totalorder %s14, 1
          %s185 = scalar_select %p184, %s14, 1
          %s186 = smul.addr %s185, 8
          %s187 = smul.addr %s186, 8
          %s188 = scalar_lea.vmem %s0, %s187
        $region36: #{tpu_custom_call.1} parent=31 // pred_fallthru
          _
      $region32: #{tpu_custom_call.1} parent=5 // pred_fallthru
        _
      %p189 = scmp.le.s32.totalorder 1, %s14
      %p190 = scmp.lt.s32.totalorder %s14, 3
      %p191 = pnand %p189, %p190
      %p192 = pneg %p191
      // Predicated region
      $region37: #{tpu_custom_call.1} parent=5 // pred_check
        _
      $region38: #{tpu_custom_call.1} parent=5 // pred_check_branch
        %194 = sbr.rel (%p191) target = $region40
      $region39: #{tpu_custom_call.1} parent=5 // pred_region
        %s195 = ssub.s32 %s14, 1
        %p196 = scmp.lt.s32.totalorder %s19, 1
        %s197 = scalar_select %p196, %s19, 1
        %s198 = smul.addr %s197, 8
        %s199 = smul.addr %s198, 8
        %s200 = scalar_lea.vmem %s0, %s199
        %p201 = pneg %p40
        %p202 = pneg %p37
        %p203 = pneg %p61
        %p204 = pneg %p58
        %p205 = pneg %p82
        %p206 = pneg %p79
        %p207 = pneg %p103
        %p208 = pneg %p100
        %p209 = pneg %p124
        %p210 = pneg %p121
        %p211 = pneg %p150
        %p212 = pneg %p147
        %s213 = sand.u32 %s137, 1
        %s214 = scalar_lea.sflag [#allocation3], %s213
        %s215 = sand.u32 %s137, 1
        %s216 = smul.addr %s215, 64
        %s217 = scalar_lea.vmem [#allocation2], %s216
        %p218 = scmp.lt.s32.totalorder %s19, 1
        %s219 = scalar_select %p218, %s19, 1
        %s220 = smul.addr %s219, 8
        %s221 = smul.addr %s220, 8
        %s222 = scalar_lea.vmem %s0, %s221
        %v223 = vld [vmem:[%s222] sm:$0xff]
        %v224 = vld [vmem:[%s222 + $0x8] sm:$0xff]
        %v225 = vld [vmem:[%s222 + $0x10] sm:$0xff]
        %v226 = vld [vmem:[%s222 + $0x18] sm:$0xff]
        %v227 = vld [vmem:[%s222 + $0x20] sm:$0xff]
        %v228 = vld [vmem:[%s222 + $0x28] sm:$0xff]
        %v229 = vld [vmem:[%s222 + $0x30] sm:$0xff]
        %v230 = vld [vmem:[%s222 + $0x38] sm:$0xff]
        %v231 = vadd.f32 %v223, %v224
        %232 = vadd.xlane.f32.xlu0 %v231
        %v233 = vpop.xlane.xlu0 %232
        %v234 = vadd.f32 %v225, %v226
        %235 = vadd.xlane.f32.xlu0 %v234
        %v236 = vpop.xlane.xlu0 %235
        %v237 = vadd.f32 %v227, %v228
        %238 = vadd.xlane.f32.xlu0 %v237
        %v239 = vpop.xlane.xlu0 %238
        %v240 = vadd.f32 %v229, %v230
        %241 = vadd.xlane.f32.xlu0 %v240
        %v242 = vpop.xlane.xlu0 %241
        %v243 = vmul.f32 %v233, 0.00390625
        %v244 = vmul.f32 %v236, 0.00390625
        %v245 = vmul.f32 %v239, 0.00390625
        %v246 = vmul.f32 %v242, 0.00390625
        %v247 = vld [vmem:[%s1] sm:$0xff]
        %v248 = vld [vmem:[%s1 + $0x8] sm:$0xff]
        %v249 = vld [vmem:[%s1 + $0x10] sm:$0xff]
        %v250 = vld [vmem:[%s1 + $0x18] sm:$0xff]
        %v251 = vld [vmem:[%s2] sm:$0x1]
        %v256 = vlaneseq
        %v257 = vand.u32 %v256, 127
        %v258 = vlaneseq
        %v259 = vshrl.u32 %v258, 7
        %v260 = vsub.s32 %v257, %v259
        %v261 = vrot.slane %v243, %v260
        %v262 = vadd.s32 %v257, 4294967288
        %v263 = vlaneseq
        %v264 = vshrl.u32 %v263, 7
        %v265 = vsub.s32 %v262, %v264
        %v266 = vrot.slane %v244, %v265
        %vm267 = vcmask 130112
        %v268 = vsel %vm267, %v266, %v261
        %v269 = vadd.s32 %v257, 4294967280
        %v270 = vlaneseq
        %v271 = vshrl.u32 %v270, 7
        %v272 = vsub.s32 %v269, %v271
        %v273 = vrot.slane %v245, %v272
        %vm274 = vcmask 195712
        %v275 = vsel %vm274, %v273, %v268
        %v276 = vadd.s32 %v257, 4294967272
        %v277 = vlaneseq
        %v278 = vshrl.u32 %v277, 7
        %v279 = vsub.s32 %v276, %v278
        %v280 = vrot.slane %v246, %v279
        %vm281 = vcmask 261312
        %v282 = vsel %vm281, %v280, %v275
        %vm283 = vcmask 261120
        %v284 = vsel %vm283, %v282, 0
        %286 = vmatprep.subr.mxu0 0.0
        %287 = vmatpush1.msra.mxu0 %v247
        %288 = vmatprep.subr.mxu0 0.0
        %289 = vmatpush1.msra.mxu0 %v248
        %290 = vmatprep.subr.mxu0 0.0
        %291 = vmatpush1.msra.mxu0 %v249
        %292 = vmatprep.subr.mxu0 0.0
        %293 = vmatpush1.msra.mxu0 %v250
        %294 = vmatprep.subr.mxu0 0.0
        %295 = vmatpush1.msra.mxu0 0.0
        %296 = vmatprep.subr.mxu0 0.0
        %297 = vmatpush1.msra.mxu0 0.0
        %298 = vmatprep.subr.mxu0 0.0
        %299 = vmatpush1.msra.mxu0 0.0
        %300 = vmatprep.subr.mxu0 0.0
        %301 = vmatpush1.msra.mxu0 0.0
        %302 = vmatprep.subr.mxu0 0.0
        %303 = vmatpush1.msra.mxu0 0.0
        %304 = vmatprep.subr.mxu0 0.0
        %305 = vmatpush1.msra.mxu0 0.0
        %306 = vmatprep.subr.mxu0 0.0
        %307 = vmatpush1.msra.mxu0 0.0
        %308 = vmatprep.subr.mxu0 0.0
        %309 = vmatpush1.msra.mxu0 0.0
        %310 = vmatprep.subr.mxu0 0.0
        %311 = vmatpush1.msra.mxu0 0.0
        %312 = vmatprep.subr.mxu0 0.0
        %313 = vmatpush1.msra.mxu0 0.0
        %314 = vmatprep.subr.mxu0 0.0
        %315 = vmatpush1.msra.mxu0 0.0
        %316 = vmatprep.subr.mxu0 0.0
        %317 = vmatpush1.msra.mxu0 0.0
        %318 = vmatprep.subr.mxu0 0.0
        %319 = vmatpush1.msra.mxu0 0.0
        %320 = vmatprep.subr.mxu0 0.0
        %321 = vmatpush1.msra.mxu0 0.0
        %322 = vmatprep.subr.mxu0 0.0
        %323 = vmatpush1.msra.mxu0 0.0
        %324 = vmatprep.subr.mxu0 0.0
        %325 = vmatpush1.msra.mxu0 0.0
        %326 = vmatprep.subr.mxu0 0.0
        %327 = vmatpush1.msra.mxu0 0.0
        %328 = vmatprep.subr.mxu0 0.0
        %329 = vmatpush1.msra.mxu0 0.0
        %330 = vmatprep.subr.mxu0 0.0
        %331 = vmatpush1.msra.mxu0 0.0
        %332 = vmatprep.subr.mxu0 0.0
        %333 = vmatpush1.msra.mxu0 0.0
        %334 = vmatprep.subr.mxu0 0.0
        %335 = vmatpush1.msra.mxu0 0.0
        %336 = vmatprep.subr.mxu0 0.0
        %337 = vmatpush1.msra.mxu0 0.0
        %338 = vmatprep.subr.mxu0 0.0
        %339 = vmatpush1.msra.mxu0 0.0
        %340 = vmatprep.subr.mxu0 0.0
        %341 = vmatpush1.msra.mxu0 0.0
        %342 = vmatprep.subr.mxu0 0.0
        %343 = vmatpush1.msra.mxu0 0.0
        %344 = vmatprep.subr.mxu0 0.0
        %345 = vmatpush1.msra.mxu0 0.0
        %346 = vmatprep.subr.mxu0 0.0
        %347 = vmatpush1.msra.mxu0 0.0
        %348 = vmatprep.subr.mxu0 0.0
        %349 = vmatpush1.msra.mxu0 0.0
        %350 = vmatprep.mubr.f32.mxu0 0.0
        %351 = vmatmul.mubr.f32.gmra.mrb[0].mxu0 %v284
        %v352 = vpop.f32.mrb[0].mxu0
        %v353 = vadd.f32 %v251, %v352
        %v354 = vpop.f32.mrb[0].mxu0
        %355 = vdwg.mxu0
        %v356 = vmax.f32 %v353, 0.0
        %v357 = vld [vmem:[%s3] sm:$0xff]
        %v358 = vld [vmem:[%s3 + $0x8] sm:$0xff]
        %v359 = vld [vmem:[%s3 + $0x10] sm:$0xff]
        %v360 = vld [vmem:[%s3 + $0x18] sm:$0xff]
        %v361 = vld [vmem:[%s3 + $0x20] sm:$0xff]
        %v362 = vld [vmem:[%s3 + $0x28] sm:$0xff]
        %v363 = vld [vmem:[%s3 + $0x30] sm:$0xff]
        %v364 = vld [vmem:[%s3 + $0x38] sm:$0xff]
        %v365 = vld [vmem:[%s3 + $0x40] sm:$0xff]
        %v366 = vld [vmem:[%s3 + $0x48] sm:$0xff]
        %v367 = vld [vmem:[%s3 + $0x50] sm:$0xff]
        %v368 = vld [vmem:[%s3 + $0x58] sm:$0xff]
        %v369 = vld [vmem:[%s3 + $0x60] sm:$0xff]
        %v370 = vld [vmem:[%s3 + $0x68] sm:$0xff]
        %v371 = vld [vmem:[%s3 + $0x70] sm:$0xff]
        %v372 = vld [vmem:[%s3 + $0x78] sm:$0xff]
        %v373 = vld [vmem:[%s4] sm:$0x1]
        %374 = vmatprep.subr.mxu0 0.0
        %375 = vmatpush1.msra.mxu0 %v357
        %376 = vmatprep.subr.mxu0 0.0
        %377 = vmatpush1.msra.mxu0 %v358
        %378 = vmatprep.subr.mxu0 0.0
        %379 = vmatpush1.msra.mxu0 %v359
        %380 = vmatprep.subr.mxu0 0.0
        %381 = vmatpush1.msra.mxu0 %v360
        %382 = vmatprep.subr.mxu0 0.0
        %383 = vmatpush1.msra.mxu0 %v361
        %384 = vmatprep.subr.mxu0 0.0
        %385 = vmatpush1.msra.mxu0 %v362
        %386 = vmatprep.subr.mxu0 0.0
        %387 = vmatpush1.msra.mxu0 %v363
        %388 = vmatprep.subr.mxu0 0.0
        %389 = vmatpush1.msra.mxu0 %v364
        %390 = vmatprep.subr.mxu0 0.0
        %391 = vmatpush1.msra.mxu0 %v365
        %392 = vmatprep.subr.mxu0 0.0
        %393 = vmatpush1.msra.mxu0 %v366
        %394 = vmatprep.subr.mxu0 0.0
        %395 = vmatpush1.msra.mxu0 %v367
        %396 = vmatprep.subr.mxu0 0.0
        %397 = vmatpush1.msra.mxu0 %v368
        %398 = vmatprep.subr.mxu0 0.0
        %399 = vmatpush1.msra.mxu0 %v369
        %400 = vmatprep.subr.mxu0 0.0
        %401 = vmatpush1.msra.mxu0 %v370
        %402 = vmatprep.subr.mxu0 0.0
        %403 = vmatpush1.msra.mxu0 %v371
        %404 = vmatprep.subr.mxu0 0.0
        %405 = vmatpush1.msra.mxu0 %v372
        %406 = vmatprep.subr.mxu0 0.0
        %407 = vmatpush1.msra.mxu0 0.0
        %408 = vmatprep.subr.mxu0 0.0
        %409 = vmatpush1.msra.mxu0 0.0
        %410 = vmatprep.subr.mxu0 0.0
        %411 = vmatpush1.msra.mxu0 0.0
        %412 = vmatprep.subr.mxu0 0.0
        %413 = vmatpush1.msra.mxu0 0.0
        %414 = vmatprep.subr.mxu0 0.0
        %415 = vmatpush1.msra.mxu0 0.0
        %416 = vmatprep.subr.mxu0 0.0
        %417 = vmatpush1.msra.mxu0 0.0
        %418 = vmatprep.subr.mxu0 0.0
        %419 = vmatpush1.msra.mxu0 0.0
        %420 = vmatprep.subr.mxu0 0.0
        %421 = vmatpush1.msra.mxu0 0.0
        %422 = vmatprep.subr.mxu0 0.0
        %423 = vmatpush1.msra.mxu0 0.0
        %424 = vmatprep.subr.mxu0 0.0
        %425 = vmatpush1.msra.mxu0 0.0
        %426 = vmatprep.subr.mxu0 0.0
        %427 = vmatpush1.msra.mxu0 0.0
        %428 = vmatprep.subr.mxu0 0.0
        %429 = vmatpush1.msra.mxu0 0.0
        %430 = vmatprep.subr.mxu0 0.0
        %431 = vmatpush1.msra.mxu0 0.0
        %432 = vmatprep.subr.mxu0 0.0
        %433 = vmatpush1.msra.mxu0 0.0
        %434 = vmatprep.subr.mxu0 0.0
        %435 = vmatpush1.msra.mxu0 0.0
        %436 = vmatprep.subr.mxu0 0.0
        %437 = vmatpush1.msra.mxu0 0.0
        %438 = vmatprep.mubr.f32.mxu0 0.0
        %439 = vmatmul.mubr.f32.gmra.mrb[0].mxu0 %v356
        %v440 = vpop.f32.mrb[0].mxu0
        %v441 = vadd.f32 %v373, %v440
        %v442 = vpop.f32.mrb[0].mxu0
        %443 = vdwg.mxu0
        %v444 = vxor.u32 %v441, 2147483648
        %v445 = vmul.f32 %v444, 1.442695
        %v446 = vpow.pop %v445
        %v447 = vadd.f32 %v446, 1.0
        %v448 = vrcp.pop %v447
        %v449 = vmul.f32 1.0, %v448
        %v450 = vlaneseq
        %v451 = vshrl.u32 %v450, 7
        %v452 = vsub.s32 0, %v451
        %v453 = vrot.slane %v449, %v452
        %455 = vbcast.lane.b32.xlu0 %v453, 256
        %v456 = vpop.permute.xlu0 %455
        %s458 = sor.u32 256, 8
        %459 = vbcast.lane.b32.xlu0 %v453, %s458
        %v460 = vpop.permute.xlu0 %459
        %s462 = sor.u32 256, 16
        %463 = vbcast.lane.b32.xlu0 %v453, %s462
        %v464 = vpop.permute.xlu0 %463
        %s466 = sor.u32 256, 24
        %467 = vbcast.lane.b32.xlu0 %v453, %s466
        %v468 = vpop.permute.xlu0 %467
        %v469 = vmul.f32 %v223, %v456
        %v470 = vmul.f32 %v224, %v456
        %v471 = vmul.f32 %v225, %v460
        %v472 = vmul.f32 %v226, %v460
        %v473 = vmul.f32 %v227, %v464
        %v474 = vmul.f32 %v228, %v464
        %v475 = vmul.f32 %v229, %v468
        %v476 = vmul.f32 %v230, %v468
        %477 = vst [vmem:[%s217] sm:$0xff] %v469
        %478 = vst [vmem:[%s217 + $0x8] sm:$0xff] %v470
        %479 = vst [vmem:[%s217 + $0x10] sm:$0xff] %v471
        %480 = vst [vmem:[%s217 + $0x18] sm:$0xff] %v472
        %481 = vst [vmem:[%s217 + $0x20] sm:$0xff] %v473
        %482 = vst [vmem:[%s217 + $0x28] sm:$0xff] %v474
        %483 = vst [vmem:[%s217 + $0x30] sm:$0xff] %v475
        %484 = vst [vmem:[%s217 + $0x38] sm:$0xff] %v476
        %s485 = sand.u32 %s137, 1
        %s486 = scalar_lea.sflag [#allocation3], %s485
        %s487 = sand.u32 %s137, 1
        %s488 = smul.addr %s487, 64
        %s489 = scalar_lea.vmem [#allocation2], %s488
        // Predicated region
        $region41: #{tpu_custom_call.1} parent=39 // pred_check
          %p490 = pneg %p147
        $region42: #{tpu_custom_call.1} parent=39 // pred_check_branch
          %492 = sbr.rel (%p490) target = $region44
        $region43: #{tpu_custom_call.1} parent=39 // pred_region
          %s494 = ssub.s32 1024, 1024
          %495 = vsyncadd %s486, %s494
          %s496 = smul.addr %s19, 8
          %s497 = smul.addr %s496, 128
          %s498 = scalar_lea.hbm %s5, %s497
          %s499 = sshll.u32 %s489, 4
          %s500 = int_to_ptr.vmem [resolvable:$true] %s499
          %505 = dma.vmem_to_hbm [thread:$0]  %s500, 1024, %s498, %s486, 256, 256, 16
        $region44: #{tpu_custom_call.1} parent=39 // pred_fallthru
          _
      $region40: #{tpu_custom_call.1} parent=5 // pred_fallthru
        _
      %p506 = scmp.le.s32.totalorder 2, %s14
      // Predicated region
      $region45: #{tpu_custom_call.1} parent=5 // pred_check
        %p507 = pneg %p506
      $region46: #{tpu_custom_call.1} parent=5 // pred_check_branch
        %509 = sbr.rel (%p507) target = $region48
      $region47: #{tpu_custom_call.1} parent=5 // pred_region
        %s510 = ssub.s32 %s14, 2
        // Predicated region
        $region49: #{tpu_custom_call.1} parent=47 // pred_check
          %p511 = pneg %p153
        $region50: #{tpu_custom_call.1} parent=47 // pred_check_branch
          %513 = sbr.rel (%p511) target = $region52
        $region51: #{tpu_custom_call.1} parent=47 // pred_region
          %s514 = sand.u32 %s138, 1
          %s515 = scalar_lea.sflag [#allocation3], %s514
          %s516 = sand.u32 %s138, 1
          %s517 = smul.addr %s516, 64
          %s518 = scalar_lea.vmem [#allocation2], %s517
          %519 = dma.done %s515, 1024
        $region52: #{tpu_custom_call.1} parent=47 // pred_fallthru
          _
      $region48: #{tpu_custom_call.1} parent=5 // pred_fallthru
        _
    $region6: #{tpu_custom_call.1} parent=1 // loop_footer
      %s18 = sadd.s32 1, %s14
    $region7: #{tpu_custom_call.1} parent=1 // loop_footer_branch
      %13 = sbr.rel target = $region3
    $region8: #{tpu_custom_call.1} parent=1 // loop_exit
      _
    %520 = vsyncpa [#allocation3], 1
    %s521 = scalar_lea.sflag [#allocation3], 1
    %522 = vsyncpa %s521, 1

// kernel: tpu_custom_call.1
$region0: #{tpu_custom_call.1}
  #allocation0 [shape = 'u32[]', space=smem, size = 0x4, offset = 0x4, fixed_abs, tag = 'smem constant byte address 0x4 - core index']
  #allocation1 [shape = 'u32[144,128]{1,0:T(1,128)}', space=vmem, size = 0x12000, scoped, tag = 'internal scratch']
  %s0 = inlined_call_operand.vmem [shape: f32[2,32,256], index: 0, kind: input, shape index: {}]
  %s1 = inlined_call_operand.vmem [shape: f32[32,128], index: 1, kind: input, shape index: {}]
  %s2 = inlined_call_operand.vmem [shape: f32[1,128], index: 2, kind: input, shape index: {}]
  %s3 = inlined_call_operand.vmem [shape: f32[128,32], index: 3, kind: input, shape index: {}]
  %s4 = inlined_call_operand.vmem [shape: f32[1,32], index: 4, kind: input, shape index: {}]
  %s5 = inlined_call_operand.hbm [shape: f32[2,32,256], index: 5, kind: output, shape index: {}]
  %s6 = sld [smem:[#allocation0]]
  $region53: #{tpu_custom_call.1} parent=0
    _
  %s8 = ssub.s32 1, %s6
  %s9 = scalar_select 0, %s8, %s6
  $region1: #{tpu_custom_call.1} parent=0
    #allocation2 [shape = 'u8[65536]{0}', space=vmem, size = 0x10000, scoped, tag = 'output window, operand 0']
    #allocation3 [shape = 's32[2]{0}', space=sflag, size = 0x8, scoped, tag = 'scoped memory for tpu_custom_call.1']
    %10 = vsyncpa [#allocation3], 0
    %s11 = scalar_lea.sflag [#allocation3], 1
    %12 = vsyncpa %s11, 0
    loop: start=0, step=1, limit=4
    $region2: #{tpu_custom_call.1} parent=1 // loop_pre_header
      _
    $region3: #{tpu_custom_call.1} parent=1 // loop_header
      %s14 = sphi 0, %s18
      %p15 = scmp.ge.s32.totalorder %s14, 4
      %s24 = sphi 0, %s26
      %s27 = sphi 0, %s24
      %s28 = sphi 0, %s27
      %s44 = sphi 0, %s28
      %s48 = sphi 0, %s48
      %s50 = sphi 0, %s48
      %s51 = sphi 0, %s50
      %s65 = sphi 0, %s51
      %s69 = sphi 0, %s69
      %s71 = sphi 0, %s69
      %s72 = sphi 0, %s71
      %s86 = sphi 0, %s72
      %s90 = sphi 0, %s90
      %s92 = sphi 0, %s90
      %s93 = sphi 0, %s92
      %s107 = sphi 0, %s93
      %s111 = sphi 0, %s111
      %s113 = sphi 0, %s111
      %s114 = sphi 0, %s113
      %s128 = sphi 0, %s114
      %s134 = sphi 0, %s136
      %s137 = sphi 0, %s134
      %s138 = sphi 0, %s137
      %s154 = sphi 0, %s138
    $region4: #{tpu_custom_call.1} parent=1 // loop_header_branch
      %17 = sbr.rel (%p15) target = $region8
    $region5: #{tpu_custom_call.1} parent=1 // loop_body
      %s19 = ssub.s32 %s14, 1
      %s20 = ssub.s32 %s14, 2
      %s21 = sadd.s32 %s14, 1
      %s22 = ssub.s32 %s14, %s21
      %p23 = scmp.eq.s32.totalorder %s22, 0
      %s25 = sadd.s32 %s24, 1
      %s26 = scalar_select %p23, %s24, %s25
      %p29 = pneg %p23
      %p30 = scmp.eq.s32.totalorder %s14, 1
      %p31 = por %p29, %p30
      %p32 = scmp.ne.s32.totalorder %s24, %s27
      %p33 = scmp.eq.s32.totalorder %s14, 0
      %p34 = por %p32, %p33
      %p35 = scmp.ne.s32.totalorder %s24, %s27
      %p36 = scmp.eq.s32.totalorder %s19, 1
      %p37 = por %p35, %p36
      %p38 = scmp.ne.s32.totalorder %s27, %s28
      %p39 = scmp.eq.s32.totalorder %s19, 0
      %p40 = por %p38, %p39
      %p41 = scmp.ne.s32.totalorder %s27, %s28
      %p42 = scmp.eq.s32.totalorder %s20, 1
      %p43 = por %p41, %p42
      %p45 = scmp.ne.s32.totalorder %s28, %s44
      %p46 = scmp.eq.s32.totalorder %s20, 0
      %p47 = por %p45, %p46
      %s49 = sadd.s32 %s48, 1
      %p52 = scmp.eq.s32.totalorder %s14, 1
      %p53 = scmp.ne.s32.totalorder %s48, %s50
      %p54 = scmp.eq.s32.totalorder %s14, 0
      %p55 = por %p53, %p54
      %p56 = scmp.ne.s32.totalorder %s48, %s50
      %p57 = scmp.eq.s32.totalorder %s19, 1
      %p58 = por %p56, %p57
      %p59 = scmp.ne.s32.totalorder %s50, %s51
      %p60 = scmp.eq.s32.totalorder %s19, 0
      %p61 = por %p59, %p60
      %p62 = scmp.ne.s32.totalorder %s50, %s51
      %p63 = scmp.eq.s32.totalorder %s20, 1
      %p64 = por %p62, %p63
      %p66 = scmp.ne.s32.totalorder %s51, %s65
      %p67 = scmp.eq.s32.totalorder %s20, 0
      %p68 = por %p66, %p67
      %s70 = sadd.s32 %s69, 1
      %p73 = scmp.eq.s32.totalorder %s14, 1
      %p74 = scmp.ne.s32.totalorder %s69, %s71
      %p75 = scmp.eq.s32.totalorder %s14, 0
      %p76 = por %p74, %p75
      %p77 = scmp.ne.s32.totalorder %s69, %s71
      %p78 = scmp.eq.s32.totalorder %s19, 1
      %p79 = por %p77, %p78
      %p80 = scmp.ne.s32.totalorder %s71, %s72
      %p81 = scmp.eq.s32.totalorder %s19, 0
      %p82 = por %p80, %p81
      %p83 = scmp.ne.s32.totalorder %s71, %s72
      %p84 = scmp.eq.s32.totalorder %s20, 1
      %p85 = por %p83, %p84
      %p87 = scmp.ne.s32.totalorder %s72, %s86
      %p88 = scmp.eq.s32.totalorder %s20, 0
      %p89 = por %p87, %p88
      %s91 = sadd.s32 %s90, 1
      %p94 = scmp.eq.s32.totalorder %s14, 1
      %p95 = scmp.ne.s32.totalorder %s90, %s92
      %p96 = scmp.eq.s32.totalorder %s14, 0
      %p97 = por %p95, %p96
      %p98 = scmp.ne.s32.totalorder %s90, %s92
      %p99 = scmp.eq.s32.totalorder %s19, 1
      %p100 = por %p98, %p99
      %p101 = scmp.ne.s32.totalorder %s92, %s93
      %p102 = scmp.eq.s32.totalorder %s19, 0
      %p103 = por %p101, %p102
      %p104 = scmp.ne.s32.totalorder %s92, %s93
      %p105 = scmp.eq.s32.totalorder %s20, 1
      %p106 = por %p104, %p105
      %p108 = scmp.ne.s32.totalorder %s93, %s107
      %p109 = scmp.eq.s32.totalorder %s20, 0
      %p110 = por %p108, %p109
      %s112 = sadd.s32 %s111, 1
      %p115 = scmp.eq.s32.totalorder %s14, 1
      %p116 = scmp.ne.s32.totalorder %s111, %s113
      %p117 = scmp.eq.s32.totalorder %s14, 0
      %p118 = por %p116, %p117
      %p119 = scmp.ne.s32.totalorder %s111, %s113
      %p120 = scmp.eq.s32.totalorder %s19, 1
      %p121 = por %p119, %p120
      %p122 = scmp.ne.s32.totalorder %s113, %s114
      %p123 = scmp.eq.s32.totalorder %s19, 0
      %p124 = por %p122, %p123
      %p125 = scmp.ne.s32.totalorder %s113, %s114
      %p126 = scmp.eq.s32.totalorder %s20, 1
      %p127 = por %p125, %p126
      %p129 = scmp.ne.s32.totalorder %s114, %s128
      %p130 = scmp.eq.s32.totalorder %s20, 0
      %p131 = por %p129, %p130
      %s132 = ssub.s32 %s14, %s21
      %p133 = scmp.eq.s32.totalorder %s132, 0
      %s135 = sadd.s32 %s134, 1
      %s136 = scalar_select %p133, %s134, %s135
      %p139 = pneg %p133
      %p140 = scmp.eq.s32.totalorder %s14, 1
      %p141 = por %p139, %p140
      %p142 = scmp.ne.s32.totalorder %s134, %s137
      %p143 = scmp.eq.s32.totalorder %s14, 0
      %p144 = por %p142, %p143
      %p145 = scmp.ne.s32.totalorder %s134, %s137
      %p146 = scmp.eq.s32.totalorder %s19, 1
      %p147 = por %p145, %p146
      %p148 = scmp.ne.s32.totalorder %s137, %s138
      %p149 = scmp.eq.s32.totalorder %s19, 0
      %p150 = por %p148, %p149
      %p151 = scmp.ne.s32.totalorder %s137, %s138
      %p152 = scmp.eq.s32.totalorder %s20, 1
      %p153 = por %p151, %p152
      %p155 = scmp.ne.s32.totalorder %s138, %s154
      %p156 = scmp.eq.s32.totalorder %s20, 0
      %p157 = por %p155, %p156
      %p158 = scmp.le.s32.totalorder 1, %s14
      %p159 = scmp.lt.s32.totalorder %s14, 3
      %p160 = pnand %p158, %p159
      %p161 = pneg %p160
      // Predicated region
      $region9: #{tpu_custom_call.1} parent=5 // pred_check
        _
      $region10: #{tpu_custom_call.1} parent=5 // pred_check_branch
        %163 = sbr.rel (%p160) target = $region12
      $region11: #{tpu_custom_call.1} parent=5 // pred_region
        %s164 = ssub.s32 %s14, 1
        // Predicated region
        $region13: #{tpu_custom_call.1} parent=11 // pred_check
          %p165 = pneg %p61
        $region14: #{tpu_custom_call.1} parent=11 // pred_check_branch
          %167 = sbr.rel (%p165) target = $region16
        $region15: #{tpu_custom_call.1} parent=11 // pred_region
          _
        $region16: #{tpu_custom_call.1} parent=11 // pred_fallthru
          _
        // Predicated region
        $region17: #{tpu_custom_call.1} parent=11 // pred_check
          %p168 = pneg %p82
        $region18: #{tpu_custom_call.1} parent=11 // pred_check_branch
          %170 = sbr.rel (%p168) target = $region20
        $region19: #{tpu_custom_call.1} parent=11 // pred_region
          _
        $region20: #{tpu_custom_call.1} parent=11 // pred_fallthru
          _
        // Predicated region
        $region21: #{tpu_custom_call.1} parent=11 // pred_check
          %p171 = pneg %p103
        $region22: #{tpu_custom_call.1} parent=11 // pred_check_branch
          %173 = sbr.rel (%p171) target = $region24
        $region23: #{tpu_custom_call.1} parent=11 // pred_region
          _
        $region24: #{tpu_custom_call.1} parent=11 // pred_fallthru
          _
        // Predicated region
        $region25: #{tpu_custom_call.1} parent=11 // pred_check
          %p174 = pneg %p124
        $region26: #{tpu_custom_call.1} parent=11 // pred_check_branch
          %176 = sbr.rel (%p174) target = $region28
        $region27: #{tpu_custom_call.1} parent=11 // pred_region
          _
        $region28: #{tpu_custom_call.1} parent=11 // pred_fallthru
          _
      $region12: #{tpu_custom_call.1} parent=5 // pred_fallthru
        _
      %p177 = scmp.lt.s32.totalorder %s14, 2
      // Predicated region
      $region29: #{tpu_custom_call.1} parent=5 // pred_check
        %p178 = pneg %p177
      $region30: #{tpu_custom_call.1} parent=5 // pred_check_branch
        %180 = sbr.rel (%p178) target = $region32
      $region31: #{tpu_custom_call.1} parent=5 // pred_region
        // Predicated region
        $region33: #{tpu_custom_call.1} parent=31 // pred_check
          %p181 = pneg %p34
        $region34: #{tpu_custom_call.1} parent=31 // pred_check_branch
          %183 = sbr.rel (%p181) target = $region36
        $region35: #{tpu_custom_call.1} parent=31 // pred_region
          %p184 = scmp.lt.s32.totalorder %s14, 1
          %s185 = scalar_select %p184, %s14, 1
          %s186 = smul.addr %s185, 8
          %s187 = smul.addr %s186, 8
          %s188 = scalar_lea.vmem %s0, %s187
        $region36: #{tpu_custom_call.1} parent=31 // pred_fallthru
          _
      $region32: #{tpu_custom_call.1} parent=5 // pred_fallthru
        _
      %p189 = scmp.le.s32.totalorder 1, %s14
      %p190 = scmp.lt.s32.totalorder %s14, 3
      %p191 = pnand %p189, %p190
      %p192 = pneg %p191
      // Predicated region
      $region37: #{tpu_custom_call.1} parent=5 // pred_check
        _
      $region38: #{tpu_custom_call.1} parent=5 // pred_check_branch
        %194 = sbr.rel (%p191) target = $region40
      $region39: #{tpu_custom_call.1} parent=5 // pred_region
        %s195 = ssub.s32 %s14, 1
        %p196 = scmp.lt.s32.totalorder %s19, 1
        %s197 = scalar_select %p196, %s19, 1
        %s198 = smul.addr %s197, 8
        %s199 = smul.addr %s198, 8
        %s200 = scalar_lea.vmem %s0, %s199
        %p201 = pneg %p40
        %p202 = pneg %p37
        %p203 = pneg %p61
        %p204 = pneg %p58
        %p205 = pneg %p82
        %p206 = pneg %p79
        %p207 = pneg %p103
        %p208 = pneg %p100
        %p209 = pneg %p124
        %p210 = pneg %p121
        %p211 = pneg %p150
        %p212 = pneg %p147
        %s213 = sand.u32 %s137, 1
        %s214 = scalar_lea.sflag [#allocation3], %s213
        %s215 = sand.u32 %s137, 1
        %s216 = smul.addr %s215, 64
        %s217 = scalar_lea.vmem [#allocation2], %s216
        %p218 = scmp.lt.s32.totalorder %s19, 1
        %s219 = scalar_select %p218, %s19, 1
        %s220 = smul.addr %s219, 8
        %s221 = smul.addr %s220, 8
        %s222 = scalar_lea.vmem %s0, %s221
        %v223 = vld [vmem:[%s222] sm:$0xff]
        %v224 = vld [vmem:[%s222 + $0x8] sm:$0xff]
        %v225 = vld [vmem:[%s222 + $0x10] sm:$0xff]
        %v226 = vld [vmem:[%s222 + $0x18] sm:$0xff]
        %v227 = vld [vmem:[%s222 + $0x20] sm:$0xff]
        %v228 = vld [vmem:[%s222 + $0x28] sm:$0xff]
        %v229 = vld [vmem:[%s222 + $0x30] sm:$0xff]
        %v230 = vld [vmem:[%s222 + $0x38] sm:$0xff]
        %v231 = vadd.f32 %v223, %v224
        %232 = vadd.xlane.f32.xlu0 %v231
        %v233 = vpop.xlane.xlu0 %232
        %v234 = vadd.f32 %v225, %v226
        %235 = vadd.xlane.f32.xlu0 %v234
        %v236 = vpop.xlane.xlu0 %235
        %v237 = vadd.f32 %v227, %v228
        %238 = vadd.xlane.f32.xlu0 %v237
        %v239 = vpop.xlane.xlu0 %238
        %v240 = vadd.f32 %v229, %v230
        %241 = vadd.xlane.f32.xlu0 %v240
        %v242 = vpop.xlane.xlu0 %241
        %v243 = vmul.f32 %v233, 0.00390625
        %v244 = vmul.f32 %v236, 0.00390625
        %v245 = vmul.f32 %v239, 0.00390625
        %v246 = vmul.f32 %v242, 0.00390625
        %v247 = vld [vmem:[%s1] sm:$0xff]
        %v248 = vld [vmem:[%s1 + $0x8] sm:$0xff]
        %v249 = vld [vmem:[%s1 + $0x10] sm:$0xff]
        %v250 = vld [vmem:[%s1 + $0x18] sm:$0xff]
        %v251 = vld [vmem:[%s2] sm:$0x1]
        %v256 = vlaneseq
        %v257 = vand.u32 %v256, 127
        %v258 = vlaneseq
        %v259 = vshrl.u32 %v258, 7
        %v260 = vsub.s32 %v257, %v259
        %v261 = vrot.slane %v243, %v260
        %v262 = vadd.s32 %v257, 4294967288
        %v263 = vlaneseq
        %v264 = vshrl.u32 %v263, 7
        %v265 = vsub.s32 %v262, %v264
        %v266 = vrot.slane %v244, %v265
        %vm267 = vcmask 130112
        %v268 = vsel %vm267, %v266, %v261
        %v269 = vadd.s32 %v257, 4294967280
        %v270 = vlaneseq
        %v271 = vshrl.u32 %v270, 7
        %v272 = vsub.s32 %v269, %v271
        %v273 = vrot.slane %v245, %v272
        %vm274 = vcmask 195712
        %v275 = vsel %vm274, %v273, %v268
        %v276 = vadd.s32 %v257, 4294967272
        %v277 = vlaneseq
        %v278 = vshrl.u32 %v277, 7
        %v279 = vsub.s32 %v276, %v278
        %v280 = vrot.slane %v246, %v279
        %vm281 = vcmask 261312
        %v282 = vsel %vm281, %v280, %v275
        %vm283 = vcmask 261120
        %v284 = vsel %vm283, %v282, 0
        %286 = vmatprep.subr.mxu0 0.0
        %287 = vmatpush1.msra.mxu0 %v247
        %288 = vmatprep.subr.mxu0 0.0
        %289 = vmatpush1.msra.mxu0 %v248
        %290 = vmatprep.subr.mxu0 0.0
        %291 = vmatpush1.msra.mxu0 %v249
        %292 = vmatprep.subr.mxu0 0.0
        %293 = vmatpush1.msra.mxu0 %v250
        %294 = vmatprep.subr.mxu0 0.0
        %295 = vmatpush1.msra.mxu0 0.0
        %296 = vmatprep.subr.mxu0 0.0
        %297 = vmatpush1.msra.mxu0 0.0
        %298 = vmatprep.subr.mxu0 0.0
        %299 = vmatpush1.msra.mxu0 0.0
        %300 = vmatprep.subr.mxu0 0.0
        %301 = vmatpush1.msra.mxu0 0.0
        %302 = vmatprep.subr.mxu0 0.0
        %303 = vmatpush1.msra.mxu0 0.0
        %304 = vmatprep.subr.mxu0 0.0
        %305 = vmatpush1.msra.mxu0 0.0
        %306 = vmatprep.subr.mxu0 0.0
        %307 = vmatpush1.msra.mxu0 0.0
        %308 = vmatprep.subr.mxu0 0.0
        %309 = vmatpush1.msra.mxu0 0.0
        %310 = vmatprep.subr.mxu0 0.0
        %311 = vmatpush1.msra.mxu0 0.0
        %312 = vmatprep.subr.mxu0 0.0
        %313 = vmatpush1.msra.mxu0 0.0
        %314 = vmatprep.subr.mxu0 0.0
        %315 = vmatpush1.msra.mxu0 0.0
        %316 = vmatprep.subr.mxu0 0.0
        %317 = vmatpush1.msra.mxu0 0.0
        %318 = vmatprep.subr.mxu0 0.0
        %319 = vmatpush1.msra.mxu0 0.0
        %320 = vmatprep.subr.mxu0 0.0
        %321 = vmatpush1.msra.mxu0 0.0
        %322 = vmatprep.subr.mxu0 0.0
        %323 = vmatpush1.msra.mxu0 0.0
        %324 = vmatprep.subr.mxu0 0.0
        %325 = vmatpush1.msra.mxu0 0.0
        %326 = vmatprep.subr.mxu0 0.0
        %327 = vmatpush1.msra.mxu0 0.0
        %328 = vmatprep.subr.mxu0 0.0
        %329 = vmatpush1.msra.mxu0 0.0
        %330 = vmatprep.subr.mxu0 0.0
        %331 = vmatpush1.msra.mxu0 0.0
        %332 = vmatprep.subr.mxu0 0.0
        %333 = vmatpush1.msra.mxu0 0.0
        %334 = vmatprep.subr.mxu0 0.0
        %335 = vmatpush1.msra.mxu0 0.0
        %336 = vmatprep.subr.mxu0 0.0
        %337 = vmatpush1.msra.mxu0 0.0
        %338 = vmatprep.subr.mxu0 0.0
        %339 = vmatpush1.msra.mxu0 0.0
        %340 = vmatprep.subr.mxu0 0.0
        %341 = vmatpush1.msra.mxu0 0.0
        %342 = vmatprep.subr.mxu0 0.0
        %343 = vmatpush1.msra.mxu0 0.0
        %344 = vmatprep.subr.mxu0 0.0
        %345 = vmatpush1.msra.mxu0 0.0
        %346 = vmatprep.subr.mxu0 0.0
        %347 = vmatpush1.msra.mxu0 0.0
        %348 = vmatprep.subr.mxu0 0.0
        %349 = vmatpush1.msra.mxu0 0.0
        %350 = vmatprep.mubr.f32.mxu0 0.0
        %351 = vmatmul.mubr.f32.gmra.mrb[0].mxu0 %v284
        %v352 = vpop.f32.mrb[0].mxu0
        %v353 = vadd.f32 %v251, %v352
        %v354 = vpop.f32.mrb[0].mxu0
        %355 = vdwg.mxu0
        %v356 = vmax.f32 %v353, 0.0
        %v357 = vld [vmem:[%s3] sm:$0xff]
        %v358 = vld [vmem:[%s3 + $0x8] sm:$0xff]
        %v359 = vld [vmem:[%s3 + $0x10] sm:$0xff]
        %v360 = vld [vmem:[%s3 + $0x18] sm:$0xff]
        %v361 = vld [vmem:[%s3 + $0x20] sm:$0xff]
        %v362 = vld [vmem:[%s3 + $0x28] sm:$0xff]
        %v363 = vld [vmem:[%s3 + $0x30] sm:$0xff]
        %v364 = vld [vmem:[%s3 + $0x38] sm:$0xff]
        %v365 = vld [vmem:[%s3 + $0x40] sm:$0xff]
        %v366 = vld [vmem:[%s3 + $0x48] sm:$0xff]
        %v367 = vld [vmem:[%s3 + $0x50] sm:$0xff]
        %v368 = vld [vmem:[%s3 + $0x58] sm:$0xff]
        %v369 = vld [vmem:[%s3 + $0x60] sm:$0xff]
        %v370 = vld [vmem:[%s3 + $0x68] sm:$0xff]
        %v371 = vld [vmem:[%s3 + $0x70] sm:$0xff]
        %v372 = vld [vmem:[%s3 + $0x78] sm:$0xff]
        %v373 = vld [vmem:[%s4] sm:$0x1]
        %374 = vmatprep.subr.mxu0 0.0
        %375 = vmatpush1.msra.mxu0 %v357
        %376 = vmatprep.subr.mxu0 0.0
        %377 = vmatpush1.msra.mxu0 %v358
        %378 = vmatprep.subr.mxu0 0.0
        %379 = vmatpush1.msra.mxu0 %v359
        %380 = vmatprep.subr.mxu0 0.0
        %381 = vmatpush1.msra.mxu0 %v360
        %382 = vmatprep.subr.mxu0 0.0
        %383 = vmatpush1.msra.mxu0 %v361
        %384 = vmatprep.subr.mxu0 0.0
        %385 = vmatpush1.msra.mxu0 %v362
        %386 = vmatprep.subr.mxu0 0.0
        %387 = vmatpush1.msra.mxu0 %v363
        %388 = vmatprep.subr.mxu0 0.0
        %389 = vmatpush1.msra.mxu0 %v364
        %390 = vmatprep.subr.mxu0 0.0
        %391 = vmatpush1.msra.mxu0 %v365
        %392 = vmatprep.subr.mxu0 0.0
        %393 = vmatpush1.msra.mxu0 %v366
        %394 = vmatprep.subr.mxu0 0.0
        %395 = vmatpush1.msra.mxu0 %v367
        %396 = vmatprep.subr.mxu0 0.0
        %397 = vmatpush1.msra.mxu0 %v368
        %398 = vmatprep.subr.mxu0 0.0
        %399 = vmatpush1.msra.mxu0 %v369
        %400 = vmatprep.subr.mxu0 0.0
        %401 = vmatpush1.msra.mxu0 %v370
        %402 = vmatprep.subr.mxu0 0.0
        %403 = vmatpush1.msra.mxu0 %v371
        %404 = vmatprep.subr.mxu0 0.0
        %405 = vmatpush1.msra.mxu0 %v372
        %406 = vmatprep.subr.mxu0 0.0
        %407 = vmatpush1.msra.mxu0 0.0
        %408 = vmatprep.subr.mxu0 0.0
        %409 = vmatpush1.msra.mxu0 0.0
        %410 = vmatprep.subr.mxu0 0.0
        %411 = vmatpush1.msra.mxu0 0.0
        %412 = vmatprep.subr.mxu0 0.0
        %413 = vmatpush1.msra.mxu0 0.0
        %414 = vmatprep.subr.mxu0 0.0
        %415 = vmatpush1.msra.mxu0 0.0
        %416 = vmatprep.subr.mxu0 0.0
        %417 = vmatpush1.msra.mxu0 0.0
        %418 = vmatprep.subr.mxu0 0.0
        %419 = vmatpush1.msra.mxu0 0.0
        %420 = vmatprep.subr.mxu0 0.0
        %421 = vmatpush1.msra.mxu0 0.0
        %422 = vmatprep.subr.mxu0 0.0
        %423 = vmatpush1.msra.mxu0 0.0
        %424 = vmatprep.subr.mxu0 0.0
        %425 = vmatpush1.msra.mxu0 0.0
        %426 = vmatprep.subr.mxu0 0.0
        %427 = vmatpush1.msra.mxu0 0.0
        %428 = vmatprep.subr.mxu0 0.0
        %429 = vmatpush1.msra.mxu0 0.0
        %430 = vmatprep.subr.mxu0 0.0
        %431 = vmatpush1.msra.mxu0 0.0
        %432 = vmatprep.subr.mxu0 0.0
        %433 = vmatpush1.msra.mxu0 0.0
        %434 = vmatprep.subr.mxu0 0.0
        %435 = vmatpush1.msra.mxu0 0.0
        %436 = vmatprep.subr.mxu0 0.0
        %437 = vmatpush1.msra.mxu0 0.0
        %438 = vmatprep.mubr.f32.mxu0 0.0
        %439 = vmatmul.mubr.f32.gmra.mrb[0].mxu0 %v356
        %v440 = vpop.f32.mrb[0].mxu0
        %v441 = vadd.f32 %v373, %v440
        %v442 = vpop.f32.mrb[0].mxu0
        %443 = vdwg.mxu0
        %v444 = vxor.u32 %v441, 2147483648
        %v445 = vmul.f32 %v444, 1.442695
        %v446 = vpow.pop %v445
        %v447 = vadd.f32 %v446, 1.0
        %v448 = vrcp.pop %v447
        %v449 = vmul.f32 1.0, %v448
        %v450 = vlaneseq
        %v451 = vshrl.u32 %v450, 7
        %v452 = vsub.s32 0, %v451
        %v453 = vrot.slane %v449, %v452
        %455 = vbcast.lane.b32.xlu0 %v453, 256
        %v456 = vpop.permute.xlu0 %455
        %s458 = sor.u32 256, 8
        %459 = vbcast.lane.b32.xlu0 %v453, %s458
        %v460 = vpop.permute.xlu0 %459
        %s462 = sor.u32 256, 16
        %463 = vbcast.lane.b32.xlu0 %v453, %s462
        %v464 = vpop.permute.xlu0 %463
        %s466 = sor.u32 256, 24
        %467 = vbcast.lane.b32.xlu0 %v453, %s466
        %v468 = vpop.permute.xlu0 %467
        %v469 = vmul.f32 %v223, %v456
        %v470 = vmul.f32 %v224, %v456
        %v471 = vmul.f32 %v225, %v460
        %v472 = vmul.f32 %v226, %v460
        %v473 = vmul.f32 %v227, %v464
        %v474 = vmul.f32 %v228, %v464
        %v475 = vmul.f32 %v229, %v468
        %v476 = vmul.f32 %v230, %v468
        %477 = vst [vmem:[%s217] sm:$0xff] %v469
        %478 = vst [vmem:[%s217 + $0x8] sm:$0xff] %v470
        %479 = vst [vmem:[%s217 + $0x10] sm:$0xff] %v471
        %480 = vst [vmem:[%s217 + $0x18] sm:$0xff] %v472
        %481 = vst [vmem:[%s217 + $0x20] sm:$0xff] %v473
        %482 = vst [vmem:[%s217 + $0x28] sm:$0xff] %v474
        %483 = vst [vmem:[%s217 + $0x30] sm:$0xff] %v475
        %484 = vst [vmem:[%s217 + $0x38] sm:$0xff] %v476
        %s485 = sand.u32 %s137, 1
        %s486 = scalar_lea.sflag [#allocation3], %s485
        %s487 = sand.u32 %s137, 1
        %s488 = smul.addr %s487, 64
        %s489 = scalar_lea.vmem [#allocation2], %s488
        // Predicated region
        $region41: #{tpu_custom_call.1} parent=39 // pred_check
          %p490 = pneg %p147
        $region42: #{tpu_custom_call.1} parent=39 // pred_check_branch
          %492 = sbr.rel (%p490) target = $region44
        $region43: #{tpu_custom_call.1} parent=39 // pred_region
          %s494 = ssub.s32 1024, 1024
          %495 = vsyncadd %s486, %s494
          %s496 = smul.addr %s19, 8
          %s497 = smul.addr %s496, 128
          %s498 = scalar_lea.hbm %s5, %s497
          %s499 = sshll.u32 %s489, 4
          %s500 = int_to_ptr.vmem [resolvable:$true] %s499
          %505 = dma.vmem_to_hbm [thread:$0]  %s500, 1024, %s498, %s486, 256, 256, 16
        $region44: #{tpu_custom_call.1} parent=39 // pred_fallthru
          _
      $region40: #{tpu_custom_call.1} parent=5 // pred_fallthru
        _
      %p506 = scmp.le.s32.totalorder 2, %s14
      // Predicated region
      $region45: #{tpu_custom_call.1} parent=5 // pred_check
        %p507 = pneg %p506
      $region46: #{tpu_custom_call.1} parent=5 // pred_check_branch
        %509 = sbr.rel (%p507) target = $region48
      $region47: #{tpu_custom_call.1} parent=5 // pred_region
        %s510 = ssub.s32 %s14, 2
        // Predicated region
        $region49: #{tpu_custom_call.1} parent=47 // pred_check
          %p511 = pneg %p153
        $region50: #{tpu_custom_call.1} parent=47 // pred_check_branch
          %513 = sbr.rel (%p511) target = $region52
        $region51: #{tpu_custom_call.1} parent=47 // pred_region
          %s514 = sand.u32 %s138, 1
          %s515 = scalar_lea.sflag [#allocation3], %s514
          %s516 = sand.u32 %s138, 1
          %s517 = smul.addr %s516, 64
          %s518 = scalar_lea.vmem [#allocation2], %s517
          %519 = dma.done %s515, 1024
        $region52: #{tpu_custom_call.1} parent=47 // pred_fallthru
          _
      $region48: #{tpu_custom_call.1} parent=5 // pred_fallthru
        _
    $region6: #{tpu_custom_call.1} parent=1 // loop_footer
      %s18 = sadd.s32 1, %s14
    $region7: #{tpu_custom_call.1} parent=1 // loop_footer_branch
      %13 = sbr.rel target = $region3
    $region8: #{tpu_custom_call.1} parent=1 // loop_exit
      _
    %520 = vsyncpa [#allocation3], 1
    %s521 = scalar_lea.sflag [#allocation3], 1
    %522 = vsyncpa %s521, 1

</llo_original>
